<compile_context>
chip_gen: v5e
topology: v5e:2x2
jax: 0.10.0
libtpu: 0.0.40
codegen_flags: <defaults>
</compile_context>

<pallas_src>
import functools

import jax
import jax.numpy as jnp
from jax.experimental import pallas as pl
from jax.experimental.pallas import tpu as pltpu

IN_F, HID_F, OUT_F = 105, 100, 61
LANE = 128


def _round_up(n, m):
    return (n + m - 1) // m * m


def _sigmoid(z):
    # sigmoid(z) == 0.5 * (tanh(z/2) + 1): a single EUP transcendental.
    return 0.5 * (jnp.tanh(0.5 * z) + 1.0)


def _mlp_block(x_ref, w1_ref, b1_ref, w2_ref, b2_ref):
    x = x_ref[...]
    # Hidden layer: sigmoid(x @ W1 + b1)  (MXU matmul, f32 accumulate).
    z1 = jnp.dot(x, w1_ref[...], preferred_element_type=jnp.float32) + b1_ref[...]
    h = _sigmoid(z1)                                      # f32 on VPU/EUP
    # Output layer: sigmoid(h @ W2 + b2); cast h to W2's dtype for the MXU.
    z2 = jnp.dot(h.astype(w2_ref.dtype), w2_ref[...],
                 preferred_element_type=jnp.float32) + b2_ref[...]
    return h, _sigmoid(z2)


def plautnet_kernel_hy(x_ref, w1_ref, b1_ref, w2_ref, b2_ref, h_ref, y_ref):
    h, y = _mlp_block(x_ref, w1_ref, b1_ref, w2_ref, b2_ref)
    h_ref[...] = h.astype(h_ref.dtype)
    y_ref[...] = y.astype(y_ref.dtype)


def plautnet_kernel_y(x_ref, w1_ref, b1_ref, w2_ref, b2_ref, y_ref):
    # y-only fast path: hidden activations never leave VMEM.
    _, y = _mlp_block(x_ref, w1_ref, b1_ref, w2_ref, b2_ref)
    y_ref[...] = y.astype(y_ref.dtype)


@functools.partial(jax.jit,
                   static_argnames=("tb_max", "return_hidden", "stream_bf16"))
def plautnet_forward(x, w1, b1, w2, b2, *, tb_max=2048, return_hidden=True,
                     stream_bf16=False):
    """x: (B, 105); w1: (105, 100); b1: (1, 100); w2: (100, 61); b2: (1, 61).

    Weights are stored as (in_features, out_features) so the kernel computes
    x @ W + b, matching PyTorch's x @ W.T + b.  Returns (hidden, output) like
    the PyTorch module (or just output if return_hidden=False).
    """
    B = x.shape[0]

    in_p = _round_up(IN_F, LANE)    # 128
    h_p = _round_up(HID_F, LANE)    # 128
    o_p = _round_up(OUT_F, LANE)    # 128

    # --- batch tiling --------------------------------------------------------
    # Big tiles amortize the ~0.35 us/step grid overhead; step count chosen so
    # padding waste stays under 8 rows/step and >=2 steps are used when the
    # batch allows (v7x megacore sharding of the "parallel" axis).
    B8 = _round_up(B, 8)
    min_steps = 2 if B8 >= 16 else 1
    n_steps = max(-(-B8 // tb_max), min_steps)
    tb = _round_up(-(-B8 // n_steps), 8)
    b_pad = tb * n_steps
    grid = (b_pad // tb,)

    io_dt = jnp.bfloat16 if stream_bf16 else jnp.float32

    # --- pad to lane-dense / tile-aligned shapes -----------------------------
    # Invariant (do not break): padded columns of W1/b1 and padded ROWS of W2
    # must be zero.  Padded hidden lanes then equal sigmoid(0)=0.5 but multiply
    # all-zero W2 rows, so real outputs are untouched.
    xp = jnp.pad(x, ((0, b_pad - B), (0, in_p - IN_F))).astype(io_dt)
    w1p = jnp.pad(w1, ((0, in_p - IN_F), (0, h_p - HID_F))).astype(io_dt)
    b1p = jnp.pad(b1, ((0, 0), (0, h_p - HID_F)))          # biases stay f32
    w2p = jnp.pad(w2, ((0, h_p - HID_F), (0, o_p - OUT_F))).astype(io_dt)
    b2p = jnp.pad(b2, ((0, 0), (0, o_p - OUT_F)))

    in_specs = [
        pl.BlockSpec((tb, in_p), lambda i: (i, 0)),        # x: tiled over batch
        pl.BlockSpec((in_p, h_p), lambda i: (0, 0)),       # W1: VMEM-resident
        pl.BlockSpec((1, h_p), lambda i: (0, 0)),          # b1: VMEM-resident
        pl.BlockSpec((h_p, o_p), lambda i: (0, 0)),        # W2: VMEM-resident
        pl.BlockSpec((1, o_p), lambda i: (0, 0)),          # b2: VMEM-resident
    ]
    compiler_params = pltpu.CompilerParams(
        dimension_semantics=("parallel",),                 # 2x TC sharding on v7x
        vmem_limit_bytes=48 * 1024 * 1024,                 # > v5e 16 MiB default,
    )                                                      # < v7x 64 MiB physical

    if return_hidden:
        h_pad, y_pad = pl.pallas_call(
            plautnet_kernel_hy,
            out_shape=(
                jax.ShapeDtypeStruct((b_pad, h_p), jnp.float32),
                jax.ShapeDtypeStruct((b_pad, o_p), jnp.float32),
            ),
            grid=grid,
            in_specs=in_specs,
            out_specs=(
                pl.BlockSpec((tb, h_p), lambda i: (i, 0)),
                pl.BlockSpec((tb, o_p), lambda i: (i, 0)),
            ),
            compiler_params=compiler_params,
        )(xp, w1p, b1p, w2p, b2p)
        return h_pad[:B, :HID_F], y_pad[:B, :OUT_F]

    y_pad = pl.pallas_call(
        plautnet_kernel_y,
        out_shape=jax.ShapeDtypeStruct((b_pad, o_p), jnp.float32),
        grid=grid,
        in_specs=in_specs,
        out_specs=pl.BlockSpec((tb, o_p), lambda i: (i, 0)),
        compiler_params=compiler_params,
    )(xp, w1p, b1p, w2p, b2p)
    return y_pad[:B, :OUT_F]


def init_params(key):
    """Deterministic init matching PlautNet.init_weights():
    weights ~ U(-0.1, 0.1), biases == -1.85."""
    init_range = 0.1
    k1, k2 = jax.random.split(key)
    # PyTorch Linear stores weight as (out, in); we keep (in, out) directly.
    w1 = jax.random.uniform(k1, (IN_F, HID_F), jnp.float32, -init_range, init_range)
    b1 = jnp.full((1, HID_F), -1.85, jnp.float32)
    w2 = jax.random.uniform(k2, (HID_F, OUT_F), jnp.float32, -init_range, init_range)
    b2 = jnp.full((1, OUT_F), -1.85, jnp.float32)
    return w1, b1, w2, b2


if __name__ == "__main__":
    key = jax.random.PRNGKey(0)
    kx, kx2, kp = jax.random.split(key, 3)
    w1, b1, w2, b2 = init_params(kp)

    # --- small-batch f32 path: tight parity with the PyTorch forward ---------
    B = 8
    x = jax.random.normal(kx, (B, IN_F), jnp.float32)
    h, y = plautnet_forward(x, w1, b1, w2, b2)
    jax.block_until_ready((h, y))

    h_ref = jax.nn.sigmoid(x @ w1 + b1)
    y_ref = jax.nn.sigmoid(h_ref @ w2 + b2)
    assert h.shape == (B, HID_F) and y.shape == (B, OUT_F)
    assert jnp.allclose(h, h_ref, atol=1e-5, rtol=1e-5)
    assert jnp.allclose(y, y_ref, atol=1e-5, rtol=1e-5)

    # --- multi-tile, bf16-streamed, y-only fast path (perf configuration) ----
    B2 = 1000
    x2 = jax.random.normal(kx2, (B2, IN_F), jnp.float32)
    y2 = plautnet_forward(x2, w1, b1, w2, b2, return_hidden=False,
                          stream_bf16=True)
    jax.block_until_ready(y2)

    h2_ref = jax.nn.sigmoid(x2 @ w1 + b1)
    y2_ref = jax.nn.sigmoid(h2_ref @ w2 + b2)
    assert y2.shape == (B2, OUT_F)
    assert jnp.allclose(y2, y2_ref, atol=2e-2, rtol=2e-2)

    print("KERNEL_OK")
</pallas_src>

<mosaic_0001>
module attributes {stable_mosaic.version = 11 : i64} {
  func.func @plautnet_kernel_hy(%arg0: i32, %arg1: memref<8x128xf32, #tpu.memory_space<vmem>>, %arg2: memref<128x128xf32, #tpu.memory_space<vmem>>, %arg3: memref<1x128xf32, #tpu.memory_space<vmem>>, %arg4: memref<128x128xf32, #tpu.memory_space<vmem>>, %arg5: memref<1x128xf32, #tpu.memory_space<vmem>>, %arg6: memref<8x128xf32, #tpu.memory_space<vmem>>, %arg7: memref<8x128xf32, #tpu.memory_space<vmem>>) attributes {dimension_semantics = [#tpu.dimension_semantics<parallel>], iteration_bounds = array<i64: 1>, scalar_prefetch = 0 : i64, scratch_operands = 0 : i64, tpu.core_type = #tpu.core_type<tc>, window_params = [{transform_indices = @transform_0, window_bounds = array<i64: 8, 128>}, {pipeline_mode = #tpu.pipeline_mode<synchronous>, transform_indices = @transform_1, window_bounds = array<i64: 128, 128>}, {pipeline_mode = #tpu.pipeline_mode<synchronous>, transform_indices = @transform_2, window_bounds = array<i64: 1, 128>}, {pipeline_mode = #tpu.pipeline_mode<synchronous>, transform_indices = @transform_3, window_bounds = array<i64: 128, 128>}, {pipeline_mode = #tpu.pipeline_mode<synchronous>, transform_indices = @transform_4, window_bounds = array<i64: 1, 128>}, {transform_indices = @transform_5, window_bounds = array<i64: 8, 128>}, {transform_indices = @transform_6, window_bounds = array<i64: 8, 128>}]} {
    %c0 = arith.constant 0 : index
    %c0_0 = arith.constant 0 : index
    %0 = vector.load %arg1[%c0, %c0_0] : memref<8x128xf32, #tpu.memory_space<vmem>>, vector<8x128xf32>
    %c0_1 = arith.constant 0 : index
    %c0_2 = arith.constant 0 : index
    %1 = vector.load %arg2[%c0_1, %c0_2] : memref<128x128xf32, #tpu.memory_space<vmem>>, vector<128x128xf32>
    %cst = arith.constant dense<0.000000e+00> : vector<8x128xf32>
    %2 = tpu.matmul %0, %1, %cst {dimension_numbers = #tpu.dot_dimension_numbers<[1], [0], [0], [1], [0, 0, 1, 1], [], []>} : vector<8x128xf32>, vector<128x128xf32>, vector<8x128xf32> -> vector<8x128xf32>
    %c0_3 = arith.constant 0 : index
    %c0_4 = arith.constant 0 : index
    %3 = vector.load %arg3[%c0_3, %c0_4] : memref<1x128xf32, #tpu.memory_space<vmem>>, vector<1x128xf32>
    %4 = vector.broadcast %3 : vector<1x128xf32> to vector<8x128xf32>
    %5 = arith.addf %2, %4 : vector<8x128xf32>
    %cst_5 = arith.constant 5.000000e-01 : f32
    %6 = vector.broadcast %cst_5 : f32 to vector<8x128xf32>
    %7 = arith.mulf %6, %5 : vector<8x128xf32>
    %8 = math.tanh %7 : vector<8x128xf32>
    %cst_6 = arith.constant 1.000000e+00 : f32
    %9 = vector.broadcast %cst_6 : f32 to vector<8x128xf32>
    %10 = arith.addf %8, %9 : vector<8x128xf32>
    %cst_7 = arith.constant 5.000000e-01 : f32
    %11 = vector.broadcast %cst_7 : f32 to vector<8x128xf32>
    %12 = arith.mulf %11, %10 : vector<8x128xf32>
    %c0_8 = arith.constant 0 : index
    %c0_9 = arith.constant 0 : index
    %13 = vector.load %arg4[%c0_8, %c0_9] : memref<128x128xf32, #tpu.memory_space<vmem>>, vector<128x128xf32>
    %cst_10 = arith.constant dense<0.000000e+00> : vector<8x128xf32>
    %14 = tpu.matmul %12, %13, %cst_10 {dimension_numbers = #tpu.dot_dimension_numbers<[1], [0], [0], [1], [0, 0, 1, 1], [], []>} : vector<8x128xf32>, vector<128x128xf32>, vector<8x128xf32> -> vector<8x128xf32>
    %c0_11 = arith.constant 0 : index
    %c0_12 = arith.constant 0 : index
    %15 = vector.load %arg5[%c0_11, %c0_12] : memref<1x128xf32, #tpu.memory_space<vmem>>, vector<1x128xf32>
    %16 = vector.broadcast %15 : vector<1x128xf32> to vector<8x128xf32>
    %17 = arith.addf %14, %16 : vector<8x128xf32>
    %cst_13 = arith.constant 5.000000e-01 : f32
    %18 = vector.broadcast %cst_13 : f32 to vector<8x128xf32>
    %19 = arith.mulf %18, %17 : vector<8x128xf32>
    %20 = math.tanh %19 : vector<8x128xf32>
    %cst_14 = arith.constant 1.000000e+00 : f32
    %21 = vector.broadcast %cst_14 : f32 to vector<8x128xf32>
    %22 = arith.addf %20, %21 : vector<8x128xf32>
    %cst_15 = arith.constant 5.000000e-01 : f32
    %23 = vector.broadcast %cst_15 : f32 to vector<8x128xf32>
    %24 = arith.mulf %23, %22 : vector<8x128xf32>
    %c0_16 = arith.constant 0 : index
    %c0_17 = arith.constant 0 : index
    %25 = vector.load %arg6[%c0_16, %c0_17] : memref<8x128xf32, #tpu.memory_space<vmem>>, vector<8x128xf32>
    tpu.vector_store %arg6[%c0_16, %c0_17], %12 {strides = array<i32>} : memref<8x128xf32, #tpu.memory_space<vmem>>, vector<8x128xf32>,
    %c0_18 = arith.constant 0 : index
    %c0_19 = arith.constant 0 : index
    %26 = vector.load %arg7[%c0_18, %c0_19] : memref<8x128xf32, #tpu.memory_space<vmem>>, vector<8x128xf32>
    tpu.vector_store %arg7[%c0_18, %c0_19], %24 {strides = array<i32>} : memref<8x128xf32, #tpu.memory_space<vmem>>, vector<8x128xf32>,
    return
  }
  func.func @transform_0(%arg0: i32) -> (i32, i32) {
    %c0_i32 = arith.constant 0 : i32
    %c0_i32_0 = arith.constant 0 : i32
    return %arg0, %c0_i32 : i32, i32
  }
  func.func @transform_1(%arg0: i32) -> (i32, i32) {
    %c0_i32 = arith.constant 0 : i32
    %c0_i32_0 = arith.constant 0 : i32
    %c0_i32_1 = arith.constant 0 : i32
    return %c0_i32, %c0_i32_0 : i32, i32
  }
  func.func @transform_2(%arg0: i32) -> (i32, i32) {
    %c0_i32 = arith.constant 0 : i32
    %c0_i32_0 = arith.constant 0 : i32
    %c0_i32_1 = arith.constant 0 : i32
    return %c0_i32, %c0_i32_0 : i32, i32
  }
  func.func @transform_3(%arg0: i32) -> (i32, i32) {
    %c0_i32 = arith.constant 0 : i32
    %c0_i32_0 = arith.constant 0 : i32
    %c0_i32_1 = arith.constant 0 : i32
    return %c0_i32, %c0_i32_0 : i32, i32
  }
  func.func @transform_4(%arg0: i32) -> (i32, i32) {
    %c0_i32 = arith.constant 0 : i32
    %c0_i32_0 = arith.constant 0 : i32
    %c0_i32_1 = arith.constant 0 : i32
    return %c0_i32, %c0_i32_0 : i32, i32
  }
  func.func @transform_5(%arg0: i32) -> (i32, i32) {
    %c0_i32 = arith.constant 0 : i32
    %c0_i32_0 = arith.constant 0 : i32
    return %arg0, %c0_i32 : i32, i32
  }
  func.func @transform_6(%arg0: i32) -> (i32, i32) {
    %c0_i32 = arith.constant 0 : i32
    %c0_i32_0 = arith.constant 0 : i32
    return %arg0, %c0_i32 : i32, i32
  }
}

</mosaic_0001>

<llo_original>
// kernel: plautnet_forward.1
$region0: #{plautnet_forward.1}
  #allocation0 [shape = 'u32[]', space=smem, size = 0x4, offset = 0x4, fixed_abs, tag = 'smem constant byte address 0x4 - core index']
  #allocation1 [shape = 'u32[72,128]{1,0:T(1,128)}', space=vmem, size = 0x9000, scoped, tag = 'internal scratch']
  %s0 = inlined_call_operand.vmem [shape: f32[8,128], index: 0, kind: input, shape index: {}]
  %s1 = inlined_call_operand.vmem [shape: f32[128,128], index: 1, kind: input, shape index: {}]
  %s2 = inlined_call_operand.vmem [shape: f32[1,128], index: 2, kind: input, shape index: {}]
  %s3 = inlined_call_operand.vmem [shape: f32[128,128], index: 3, kind: input, shape index: {}]
  %s4 = inlined_call_operand.vmem [shape: f32[1,128], index: 4, kind: input, shape index: {}]
  %s5 = inlined_call_operand.hbm [shape: f32[8,128], index: 5, kind: output, shape index: {0}]
  %s6 = inlined_call_operand.hbm [shape: f32[8,128], index: 6, kind: output, shape index: {1}]
  %7 = xla_tuple %s5, %s6
  %s8 = sld [smem:[#allocation0]]
  $region38: #{plautnet_forward.1} parent=0
    _
  %s10 = ssub.s32 1, %s8
  %s11 = scalar_select 0, %s10, %s8
  $region1: #{plautnet_forward.1} parent=0
    #allocation2 [shape = 'u8[4096]{0}', space=vmem, size = 0x1000, scoped, tag = 'output window, operand 0, single buffered']
    #allocation3 [shape = 's32[1]{0}', space=sflag, size = 0x4, scoped, tag = 'scoped memory for plautnet_forward.1']
    #allocation4 [shape = 'u8[4096]{0}', space=vmem, size = 0x1000, scoped, tag = 'output window, operand 1, single buffered']
    #allocation5 [shape = 's32[1]{0}', space=sflag, size = 0x4, scoped, tag = 'scoped memory for plautnet_forward.1']
    %12 = vsyncpa [#allocation3], 0
    %13 = vsyncpa [#allocation5], 0
    // Predicated region
    $region2: #{plautnet_forward.1} parent=1 // pred_check
      _
    $region3: #{plautnet_forward.1} parent=1 // pred_check_branch
      %15 = sbr.rel (0) target = $region5
    $region4: #{plautnet_forward.1} parent=1 // pred_region
      _
    $region5: #{plautnet_forward.1} parent=1 // pred_fallthru
      _
    // Predicated region
    $region6: #{plautnet_forward.1} parent=1 // pred_check
      _
    $region7: #{plautnet_forward.1} parent=1 // pred_check_branch
      %17 = sbr.rel (0) target = $region9
    $region8: #{plautnet_forward.1} parent=1 // pred_region
      _
    $region9: #{plautnet_forward.1} parent=1 // pred_fallthru
      _
    // Predicated region
    $region10: #{plautnet_forward.1} parent=1 // pred_check
      _
    $region11: #{plautnet_forward.1} parent=1 // pred_check_branch
      %19 = sbr.rel (0) target = $region13
    $region12: #{plautnet_forward.1} parent=1 // pred_region
      _
    $region13: #{plautnet_forward.1} parent=1 // pred_fallthru
      _
    // Predicated region
    $region14: #{plautnet_forward.1} parent=1 // pred_check
      _
    $region15: #{plautnet_forward.1} parent=1 // pred_check_branch
      %21 = sbr.rel (0) target = $region17
    $region16: #{plautnet_forward.1} parent=1 // pred_region
      _
    $region17: #{plautnet_forward.1} parent=1 // pred_fallthru
      _
    // Predicated region
    $region18: #{plautnet_forward.1} parent=1 // pred_check
      _
    $region19: #{plautnet_forward.1} parent=1 // pred_check_branch
      %23 = sbr.rel (0) target = $region21
    $region20: #{plautnet_forward.1} parent=1 // pred_region
      _
    $region21: #{plautnet_forward.1} parent=1 // pred_fallthru
      _
    %v24 = vld [vmem:[%s0] sm:$0xff]
    %v25 = vld [vmem:[%s1] sm:$0xff]
    %v26 = vld [vmem:[%s1 + $0x8] sm:$0xff]
    %v27 = vld [vmem:[%s1 + $0x10] sm:$0xff]
    %v28 = vld [vmem:[%s1 + $0x18] sm:$0xff]
    %v29 = vld [vmem:[%s1 + $0x20] sm:$0xff]
    %v30 = vld [vmem:[%s1 + $0x28] sm:$0xff]
    %v31 = vld [vmem:[%s1 + $0x30] sm:$0xff]
    %v32 = vld [vmem:[%s1 + $0x38] sm:$0xff]
    %v33 = vld [vmem:[%s1 + $0x40] sm:$0xff]
    %v34 = vld [vmem:[%s1 + $0x48] sm:$0xff]
    %v35 = vld [vmem:[%s1 + $0x50] sm:$0xff]
    %v36 = vld [vmem:[%s1 + $0x58] sm:$0xff]
    %v37 = vld [vmem:[%s1 + $0x60] sm:$0xff]
    %v38 = vld [vmem:[%s1 + $0x68] sm:$0xff]
    %v39 = vld [vmem:[%s1 + $0x70] sm:$0xff]
    %v40 = vld [vmem:[%s1 + $0x78] sm:$0xff]
    %v41 = vld [vmem:[%s2] sm:$0x1]
    %v43 = vperm.slane %v41, 0
    %45 = vmatpush.msra.mxu0 %v40
    %46 = vmatpush.msra.mxu0 %v39
    %47 = vmatpush.msra.mxu0 %v38
    %48 = vmatpush.msra.mxu0 %v37
    %49 = vmatpush.msra.mxu0 %v36
    %50 = vmatpush.msra.mxu0 %v35
    %51 = vmatpush.msra.mxu0 %v34
    %52 = vmatpush.msra.mxu0 %v33
    %53 = vmatpush.msra.mxu0 %v32
    %54 = vmatpush.msra.mxu0 %v31
    %55 = vmatpush.msra.mxu0 %v30
    %56 = vmatpush.msra.mxu0 %v29
    %57 = vmatpush.msra.mxu0 %v28
    %58 = vmatpush.msra.mxu0 %v27
    %59 = vmatpush.msra.mxu0 %v26
    %60 = vmatpush.msra.mxu0 %v25
    %61 = vmatmul.f32.gmra.mxu0 %v24
    %v62 = vpop.f32.mrf.mxu0
    %v63 = vadd.f32 %v43, %v62
    %64 = vdwg.mxu0
    %v65 = vmul.f32 %v63, 0.5
    %v66 = vtanh.pop %v65
    %v67 = vadd.f32 %v66, 1.0
    %v68 = vmul.f32 %v67, 0.5
    %v69 = vld [vmem:[%s3] sm:$0xff]
    %v70 = vld [vmem:[%s3 + $0x8] sm:$0xff]
    %v71 = vld [vmem:[%s3 + $0x10] sm:$0xff]
    %v72 = vld [vmem:[%s3 + $0x18] sm:$0xff]
    %v73 = vld [vmem:[%s3 + $0x20] sm:$0xff]
    %v74 = vld [vmem:[%s3 + $0x28] sm:$0xff]
    %v75 = vld [vmem:[%s3 + $0x30] sm:$0xff]
    %v76 = vld [vmem:[%s3 + $0x38] sm:$0xff]
    %v77 = vld [vmem:[%s3 + $0x40] sm:$0xff]
    %v78 = vld [vmem:[%s3 + $0x48] sm:$0xff]
    %v79 = vld [vmem:[%s3 + $0x50] sm:$0xff]
    %v80 = vld [vmem:[%s3 + $0x58] sm:$0xff]
    %v81 = vld [vmem:[%s3 + $0x60] sm:$0xff]
    %v82 = vld [vmem:[%s3 + $0x68] sm:$0xff]
    %v83 = vld [vmem:[%s3 + $0x70] sm:$0xff]
    %v84 = vld [vmem:[%s3 + $0x78] sm:$0xff]
    %v85 = vld [vmem:[%s4] sm:$0x1]
    %v87 = vperm.slane %v85, 0
    %89 = vmatpush.msra.mxu0 %v84
    %90 = vmatpush.msra.mxu0 %v83
    %91 = vmatpush.msra.mxu0 %v82
    %92 = vmatpush.msra.mxu0 %v81
    %93 = vmatpush.msra.mxu0 %v80
    %94 = vmatpush.msra.mxu0 %v79
    %95 = vmatpush.msra.mxu0 %v78
    %96 = vmatpush.msra.mxu0 %v77
    %97 = vmatpush.msra.mxu0 %v76
    %98 = vmatpush.msra.mxu0 %v75
    %99 = vmatpush.msra.mxu0 %v74
    %100 = vmatpush.msra.mxu0 %v73
    %101 = vmatpush.msra.mxu0 %v72
    %102 = vmatpush.msra.mxu0 %v71
    %103 = vmatpush.msra.mxu0 %v70
    %104 = vmatpush.msra.mxu0 %v69
    %105 = vmatmul.f32.gmra.mxu0 %v68
    %v106 = vpop.f32.mrf.mxu0
    %v107 = vadd.f32 %v87, %v106
    %108 = vdwg.mxu0
    %v109 = vmul.f32 %v107, 0.5
    %v110 = vtanh.pop %v109
    %v111 = vadd.f32 %v110, 1.0
    %v112 = vmul.f32 %v111, 0.5
    %113 = vst [vmem:[#allocation2] sm:$0xff] %v68
    %114 = vst [vmem:[#allocation4] sm:$0xff] %v112
    // Predicated region
    $region22: #{plautnet_forward.1} parent=1 // pred_check
      _
    $region23: #{plautnet_forward.1} parent=1 // pred_check_branch
      %116 = sbr.rel (0) target = $region25
    $region24: #{plautnet_forward.1} parent=1 // pred_region
      %118 = vsyncadd [#allocation3], 0
      %s120 = sshll.u32 [#allocation2], 4
      %s121 = int_to_ptr.vmem [resolvable:$true] %s120
      %s122 = sshll.u32 %s5, 4
      %s123 = int_to_ptr.hbm [resolvable:$true] %s122
      %125 = dma.vmem_to_hbm [thread:$0]  %s121, 128, %s123, [#allocation3]
    $region25: #{plautnet_forward.1} parent=1 // pred_fallthru
      _
    // Predicated region
    $region26: #{plautnet_forward.1} parent=1 // pred_check
      _
    $region27: #{plautnet_forward.1} parent=1 // pred_check_branch
      %127 = sbr.rel (0) target = $region29
    $region28: #{plautnet_forward.1} parent=1 // pred_region
      %129 = vsyncadd [#allocation5], 0
      %s131 = sshll.u32 [#allocation4], 4
      %s132 = int_to_ptr.vmem [resolvable:$true] %s131
      %s133 = sshll.u32 %s6, 4
      %s134 = int_to_ptr.hbm [resolvable:$true] %s133
      %136 = dma.vmem_to_hbm [thread:$0]  %s132, 128, %s134, [#allocation5]
    $region29: #{plautnet_forward.1} parent=1 // pred_fallthru
      _
    // Predicated region
    $region30: #{plautnet_forward.1} parent=1 // pred_check
      _
    $region31: #{plautnet_forward.1} parent=1 // pred_check_branch
      %138 = sbr.rel (0) target = $region33
    $region32: #{plautnet_forward.1} parent=1 // pred_region
      %140 = dma.done [#allocation3], 128
    $region33: #{plautnet_forward.1} parent=1 // pred_fallthru
      _
    // Predicated region
    $region34: #{plautnet_forward.1} parent=1 // pred_check
      _
    $region35: #{plautnet_forward.1} parent=1 // pred_check_branch
      %142 = sbr.rel (0) target = $region37
    $region36: #{plautnet_forward.1} parent=1 // pred_region
      %144 = dma.done [#allocation5], 128
    $region37: #{plautnet_forward.1} parent=1 // pred_fallthru
      _
    %145 = vsyncpa [#allocation3], 1
    %146 = vsyncpa [#allocation5], 1

</llo_original>
